<compile_context>
chip_gen: v6e
topology: v6e:2x2x1
jax: 0.10.0
libtpu: 0.0.40
codegen_flags: <defaults>
</compile_context>

<pallas_src>
import functools

import jax
import jax.numpy as jnp
from jax import lax
from jax.experimental import pallas as pl
from jax.experimental.pallas import tpu as pltpu


# ----------------------------- Pallas kernel ---------------------------------

def rmsnorm_kernel(x_ref, w_ref, o_ref, *, eps):
    # x_ref: (tile_rows, D), w_ref: (1, D), o_ref: (tile_rows, D)
    x = x_ref[...]
    xf = x.astype(jnp.float32)                       # stats always in fp32

    # variance = x.pow(2).mean(-1, keepdim=True)
    var = jnp.mean(xf * xf, axis=-1, keepdims=True)  # XLU lane-reduce, fp32
    inv = lax.rsqrt(var + eps)                       # EUP rsqrt (free slot vs VALU)

    # Cast normalized activations back to the activation dtype before the weight
    # multiply (HF/Qwen3 semantics; bf16 multiply on v6e/v7x, no fp32 upcast of w).
    xn = (xf * inv).astype(x.dtype)
    o_ref[...] = (xn * w_ref[...].astype(x.dtype)).astype(o_ref.dtype)


# ------------------------------ host wrapper ----------------------------------

def _sublane_multiple(dtype):
    # Packed sublane layout: 8 rows for 4-byte, 16 for 2-byte, 32 for 1-byte dtypes.
    return {4: 8, 2: 16, 1: 32}.get(jnp.dtype(dtype).itemsize, 8)


def _round_up(a, b):
    return (a + b - 1) // b * b


def rmsnorm(x, weight, *, eps=1e-6, target_block_bytes=2 * 1024 * 1024):
    """Applies RMSNorm over the last dimension of x. weight has shape (D,)."""
    orig_shape = x.shape
    D = orig_shape[-1]
    x2 = x.reshape(-1, D)                  # (R, D): lane-dense slab (layout plumbing only)
    R = x2.shape[0]

    itemsize = jnp.dtype(x.dtype).itemsize
    sub = _sublane_multiple(x.dtype)

    # Byte-targeted tile: largest sublane-multiple row count giving ~target_block_bytes
    # per input block, clamped to [sub, round_up(R, sub)].
    row_bytes = D * itemsize
    tile = max(sub, (target_block_bytes // max(row_bytes, 1)) // sub * sub)
    tile = min(tile, _round_up(R, sub))

    # Pad R up to a multiple of the tile (no degenerate tiles, no ragged blocks).
    R_pad = _round_up(R, tile)
    if R_pad != R:
        x2 = jnp.pad(x2, ((0, R_pad - R), (0, 0)))

    w2 = weight.reshape(1, D)

    # Explicit VMEM budget: double-buffered in/out blocks + fp32 intermediates + weight.
    in_blk = tile * D * itemsize
    out_blk = tile * D * itemsize
    f32_tmp = tile * D * 4
    vmem_need = 2 * (in_blk + out_blk) + 2 * f32_tmp + 2 * D * 4 + (1 << 20)
    vmem_limit = int(min(max(vmem_need, 16 * 1024 * 1024), 48 * 1024 * 1024))

    out = pl.pallas_call(
        functools.partial(rmsnorm_kernel, eps=eps),
        out_shape=jax.ShapeDtypeStruct((R_pad, D), x.dtype),
        grid=(R_pad // tile,),
        in_specs=[
            pl.BlockSpec((tile, D), lambda i: (i, 0)),   # activations: tiled over rows
            pl.BlockSpec((1, D), lambda i: (0, 0)),      # weight: tiny, stays resident
        ],
        out_specs=pl.BlockSpec((tile, D), lambda i: (i, 0)),
        compiler_params=pltpu.CompilerParams(
            dimension_semantics=("parallel",),           # shards across 2 TCs on v7x
            vmem_limit_bytes=vmem_limit,
        ),
    )(x2, w2)

    if R_pad != R:
        out = out[:R]
    return out.reshape(orig_shape)


# --------------------------- pure-JAX reference -------------------------------

def rmsnorm_reference(x, weight, *, eps=1e-6):
    xf = x.astype(jnp.float32)
    var = jnp.mean(xf * xf, axis=-1, keepdims=True)
    xn = (xf * lax.rsqrt(var + eps)).astype(x.dtype)
    return (xn * weight.astype(x.dtype)).astype(x.dtype)


# ----------------------------------- main --------------------------------------

if __name__ == "__main__":
    eps = 1e-6
    key = jax.random.PRNGKey(0)
    kx, kw, kx2 = jax.random.split(key, 3)

    # --- main test: (batch=2, seq=8, hidden=128), fp32 ---
    batch, seq, hidden = 2, 8, 128
    x = jax.random.normal(kx, (batch, seq, hidden), jnp.float32)
    weight = 1.0 + 0.1 * jax.random.normal(kw, (hidden,), jnp.float32)

    out = jax.block_until_ready(rmsnorm(x, weight, eps=eps))
    ref = jax.block_until_ready(rmsnorm_reference(x, weight, eps=eps))
    assert out.shape == (batch, seq, hidden)
    assert jnp.allclose(out, ref, rtol=1e-6, atol=1e-6), (
        f"max abs diff {jnp.max(jnp.abs(out - ref))}")

    # --- padding path: R = 3*5 = 15 rows (not a sublane multiple) ---
    x_odd = jax.random.normal(kx2, (3, 5, hidden), jnp.float32)
    out_odd = jax.block_until_ready(rmsnorm(x_odd, weight, eps=eps))
    ref_odd = rmsnorm_reference(x_odd, weight, eps=eps)
    assert out_odd.shape == (3, 5, hidden)
    assert jnp.allclose(out_odd, ref_odd, rtol=1e-6, atol=1e-6), (
        f"max abs diff {jnp.max(jnp.abs(out_odd - ref_odd))}")

    # --- bf16 path: fp32 stats, bf16 final multiply ---
    xb = x.astype(jnp.bfloat16)
    wb = weight.astype(jnp.bfloat16)
    out_b = jax.block_until_ready(rmsnorm(xb, wb, eps=eps))
    ref_b = rmsnorm_reference(xb, wb, eps=eps)
    assert out_b.dtype == jnp.bfloat16
    assert jnp.allclose(out_b.astype(jnp.float32), ref_b.astype(jnp.float32),
                        rtol=2e-2, atol=2e-2), (
        f"max abs diff {jnp.max(jnp.abs(out_b.astype(jnp.float32) - ref_b.astype(jnp.float32)))}")

    print("KERNEL_OK")
</pallas_src>

<mosaic_0001>
module attributes {stable_mosaic.version = 11 : i64} {
  func.func @rmsnorm_kernel(%arg0: i32, %arg1: memref<16x128xf32, #tpu.memory_space<vmem>>, %arg2: memref<1x128xf32, #tpu.memory_space<vmem>>, %arg3: memref<16x128xf32, #tpu.memory_space<vmem>>) attributes {dimension_semantics = [#tpu.dimension_semantics<parallel>], iteration_bounds = array<i64: 1>, scalar_prefetch = 0 : i64, scratch_operands = 0 : i64, tpu.core_type = #tpu.core_type<tc>, window_params = [{transform_indices = @transform_0, window_bounds = array<i64: 16, 128>}, {pipeline_mode = #tpu.pipeline_mode<synchronous>, transform_indices = @transform_1, window_bounds = array<i64: 1, 128>}, {transform_indices = @transform_2, window_bounds = array<i64: 16, 128>}]} {
    %c0 = arith.constant 0 : index
    %c0_0 = arith.constant 0 : index
    %0 = vector.load %arg1[%c0, %c0_0] : memref<16x128xf32, #tpu.memory_space<vmem>>, vector<16x128xf32>
    %1 = arith.mulf %0, %0 : vector<16x128xf32>
    %cst = arith.constant dense<0.000000e+00> : vector<16xf32>
    %2 = vector.multi_reduction <add>, %1, %cst [1] : vector<16x128xf32> to vector<16xf32>
    %3 = vector.shape_cast %2 : vector<16xf32> to vector<16x1xf32>
    %cst_1 = arith.constant 1.280000e+02 : f32
    %4 = vector.broadcast %cst_1 : f32 to vector<16x1xf32>
    %5 = arith.divf %3, %4 : vector<16x1xf32>
    %cst_2 = arith.constant 9.99999997E-7 : f32
    %6 = vector.broadcast %cst_2 : f32 to vector<16x1xf32>
    %7 = arith.addf %5, %6 : vector<16x1xf32>
    %8 = math.rsqrt %7 : vector<16x1xf32>
    %9 = vector.broadcast %8 : vector<16x1xf32> to vector<16x128xf32>
    %10 = arith.mulf %0, %9 : vector<16x128xf32>
    %c0_3 = arith.constant 0 : index
    %c0_4 = arith.constant 0 : index
    %11 = vector.load %arg2[%c0_3, %c0_4] : memref<1x128xf32, #tpu.memory_space<vmem>>, vector<1x128xf32>
    %12 = vector.broadcast %11 : vector<1x128xf32> to vector<16x128xf32>
    %13 = arith.mulf %10, %12 : vector<16x128xf32>
    %c0_5 = arith.constant 0 : index
    %c0_6 = arith.constant 0 : index
    %14 = vector.load %arg3[%c0_5, %c0_6] : memref<16x128xf32, #tpu.memory_space<vmem>>, vector<16x128xf32>
    tpu.vector_store %arg3[%c0_5, %c0_6], %13 {strides = array<i32>} : memref<16x128xf32, #tpu.memory_space<vmem>>, vector<16x128xf32>,
    return
  }
  func.func @transform_0(%arg0: i32) -> (i32, i32) {
    %c0_i32 = arith.constant 0 : i32
    %c0_i32_0 = arith.constant 0 : i32
    return %arg0, %c0_i32 : i32, i32
  }
  func.func @transform_1(%arg0: i32) -> (i32, i32) {
    %c0_i32 = arith.constant 0 : i32
    %c0_i32_0 = arith.constant 0 : i32
    %c0_i32_1 = arith.constant 0 : i32
    return %c0_i32, %c0_i32_0 : i32, i32
  }
  func.func @transform_2(%arg0: i32) -> (i32, i32) {
    %c0_i32 = arith.constant 0 : i32
    %c0_i32_0 = arith.constant 0 : i32
    return %arg0, %c0_i32 : i32, i32
  }
}

</mosaic_0001>

<llo_original>
// kernel: tpu_custom_call.1
$region0: #{tpu_custom_call.1}
  #allocation0 [shape = 'u32[]', space=smem, size = 0x4, offset = 0x4, fixed_abs, tag = 'smem constant byte address 0x4 - core index']
  #allocation1 [shape = 'u32[144,128]{1,0:T(1,128)}', space=vmem, size = 0x12000, scoped, tag = 'internal scratch']
  %s0 = inlined_call_operand.hbm [shape: f32[16,128], index: 0, kind: input, shape index: {}]
  %s1 = inlined_call_operand.vmem [shape: f32[1,128], index: 1, kind: input, shape index: {}]
  %s2 = inlined_call_operand.hbm [shape: f32[16,128], index: 2, kind: output, shape index: {}]
  %s3 = sld [smem:[#allocation0]]
  $region22: #{tpu_custom_call.1} parent=0
    _
  %s5 = ssub.s32 1, %s3
  %s6 = scalar_select 0, %s5, %s3
  $region1: #{tpu_custom_call.1} parent=0
    #allocation2 [shape = 'u8[8192]{0}', space=vmem, size = 0x2000, scoped, tag = 'input window, operand 0, single buffered']
    #allocation3 [shape = 's32[1]{0}', space=sflag, size = 0x4, scoped, tag = 'scoped memory for tpu_custom_call.1']
    #allocation4 [shape = 's32[1]{0}', space=sflag, size = 0x4, scoped, tag = 'scoped memory for tpu_custom_call.1']
    #allocation5 [shape = 'u8[8192]{0}', space=vmem, size = 0x2000, scoped, tag = 'output window, operand 0, single buffered']
    %7 = vsyncpa [#allocation3], 0
    %8 = vsyncpa [#allocation4], 0
    // Predicated region
    $region2: #{tpu_custom_call.1} parent=1 // pred_check
      _
    $region3: #{tpu_custom_call.1} parent=1 // pred_check_branch
      %10 = sbr.rel (0) target = $region5
    $region4: #{tpu_custom_call.1} parent=1 // pred_region
      %s12 = ssub.s32 256, 256
      %13 = vsyncadd [#allocation3], %s12
      %s14 = sshll.u32 [#allocation2], 4
      %s15 = int_to_ptr.vmem [resolvable:$true] %s14
      %20 = dma.hbm_to_vmem [thread:$0]  %s0, 256, %s15, [#allocation3], 128, 128, 8
    $region5: #{tpu_custom_call.1} parent=1 // pred_fallthru
      _
    // Predicated region
    $region6: #{tpu_custom_call.1} parent=1 // pred_check
      _
    $region7: #{tpu_custom_call.1} parent=1 // pred_check_branch
      %22 = sbr.rel (0) target = $region9
    $region8: #{tpu_custom_call.1} parent=1 // pred_region
      _
    $region9: #{tpu_custom_call.1} parent=1 // pred_fallthru
      _
    // Predicated region
    $region10: #{tpu_custom_call.1} parent=1 // pred_check
      _
    $region11: #{tpu_custom_call.1} parent=1 // pred_check_branch
      %24 = sbr.rel (0) target = $region13
    $region12: #{tpu_custom_call.1} parent=1 // pred_region
      %25 = dma.done [#allocation3], 256
    $region13: #{tpu_custom_call.1} parent=1 // pred_fallthru
      _
    %v26 = vld [vmem:[#allocation2] sm:$0xff]
    %v27 = vld [vmem:[#allocation2 + $0x8] sm:$0xff]
    %v28 = vmul.f32 %v26, %v26
    %v29 = vmul.f32 %v27, %v27
    %30 = vadd.xlane.f32.xlu0 %v28
    %v31 = vpop.xlane.xlu0 %30
    %32 = vadd.xlane.f32.xlu0 %v29
    %v33 = vpop.xlane.xlu0 %32
    %v34 = vrcp.pop 128.0
    %v35 = vmul.f32 %v31, %v34
    %v36 = vmul.f32 %v33, %v34
    %v37 = vadd.f32 %v35, 1e-06
    %v38 = vadd.f32 %v36, 1e-06
    %v39 = vrsqrt.pop %v37
    %v40 = vrsqrt.pop %v38
    %v41 = vmul.f32 %v26, %v39
    %v42 = vmul.f32 %v27, %v40
    %v43 = vld [vmem:[%s1] sm:$0x1]
    %v45 = vlaneseq
    %v46 = vshrl.u32 %v45, 7
    %v47 = vsub.s32 0, %v46
    %v48 = vrot.slane %v43, %v47
    %v50 = vmul.f32 %v41, %v48
    %v51 = vmul.f32 %v42, %v48
    %52 = vst [vmem:[#allocation5] sm:$0xff] %v50
    %53 = vst [vmem:[#allocation5 + $0x8] sm:$0xff] %v51
    // Predicated region
    $region14: #{tpu_custom_call.1} parent=1 // pred_check
      _
    $region15: #{tpu_custom_call.1} parent=1 // pred_check_branch
      %55 = sbr.rel (0) target = $region17
    $region16: #{tpu_custom_call.1} parent=1 // pred_region
      %s57 = ssub.s32 256, 256
      %58 = vsyncadd [#allocation4], %s57
      %s59 = sshll.u32 [#allocation5], 4
      %s60 = int_to_ptr.vmem [resolvable:$true] %s59
      %65 = dma.vmem_to_hbm [thread:$0]  %s60, 256, %s2, [#allocation4], 128, 128, 8
    $region17: #{tpu_custom_call.1} parent=1 // pred_fallthru
      _
    // Predicated region
    $region18: #{tpu_custom_call.1} parent=1 // pred_check
      _
    $region19: #{tpu_custom_call.1} parent=1 // pred_check_branch
      %67 = sbr.rel (0) target = $region21
    $region20: #{tpu_custom_call.1} parent=1 // pred_region
      %68 = dma.done [#allocation4], 256
    $region21: #{tpu_custom_call.1} parent=1 // pred_fallthru
      _
    %69 = vsyncpa [#allocation3], 1
    %70 = vsyncpa [#allocation4], 1

</llo_original>
